<compile_context>
chip_gen: v5e
topology: v5e:2x2
jax: 0.10.0
libtpu: 0.0.40
codegen_flags: <defaults>
</compile_context>

<pallas_src>
import numpy as np
import jax
import jax.numpy as jnp
from jax.experimental import pallas as pl
from jax.experimental.pallas import tpu as pltpu

S, B, C = 20, 2, 20
N = 1
NCH = C + B * 5            # 30 channels
NCELL = S * S              # 400 flattened grid cells -> lane dimension
PRED_FLAT = NCELL * NCH    # 12000
LAMBDA_COORD = 5.0
LAMBDA_NOOBJ = 0.5

# Packed-input row layout (56 rows x 400 lanes, f32):
#   0      conf1 = pred[..., 20]              cols = i*S + j
#   1      conf2 = pred[..., 25]
#   2:8    xy    = [b1x, b1y, b2x, b2y, btx, bty]
#   8:14   wh    = [b1w, b1h, b2w, b2h, btw, bth]
#   14     exists = target[..., 20]
#   15     pad (never read)
#   16:36  tcls      rows = a, cols = b*C + c  -> target[a, b, c]
#   36:56  exists_bc rows = a, cols = b*C + c  -> target[a, b, 20]


def _build_pack_index() -> np.ndarray:
    col = np.arange(NCELL, dtype=np.int32)
    pred = lambda ch: col * NCH + ch
    targ = lambda ch: PRED_FLAT + col * NCH + ch
    idx = np.empty((56, NCELL), dtype=np.int32)
    idx[0] = pred(20)                       # conf1
    idx[1] = pred(25)                       # conf2
    idx[2], idx[3] = pred(21), pred(22)     # box1 x, y
    idx[4], idx[5] = pred(26), pred(27)     # box2 x, y
    idx[6], idx[7] = targ(21), targ(22)     # tbox x, y
    idx[8], idx[9] = pred(23), pred(24)     # box1 w, h
    idx[10], idx[11] = pred(28), pred(29)   # box2 w, h
    idx[12], idx[13] = targ(23), targ(24)   # tbox w, h
    idx[14] = targ(20)                      # exists (cols = a*S + b)
    idx[15] = idx[14]                       # pad row (never read)
    b = col // C
    c = col % C
    for a in range(C):
        base = PRED_FLAT + (a * S + b) * NCH
        idx[16 + a] = base + c              # tcls[a, b*C+c]      = target[a,b,c]
        idx[36 + a] = base + 20             # exists_bc[a, b*C+c] = target[a,b,20]
    return idx


_PACK_IDX = _build_pack_index()


# --------------------------------------------------------------------------
# Kernel body (single block, no grid)
# --------------------------------------------------------------------------
def _yolo_loss_kernel(pk_ref, out_ref):
    conf1 = pk_ref[0:1, :]
    conf2 = pk_ref[1:2, :]
    xy = pk_ref[2:8, :]          # b1x,b1y,b2x,b2y,btx,bty
    wh = pk_ref[8:14, :]         # b1w,b1h,b2w,b2h,btw,bth
    exists = pk_ref[14:15, :]
    tcls = pk_ref[16:36, :]
    exists_bc = pk_ref[36:56, :]

    # ---- best box via division-free IoU comparison (batched corner math) ---
    half = wh * 0.5
    cmin = xy - half             # (6,400): per-box x1, y1
    cmax = xy + half             # (6,400): per-box x2, y2
    tmin = cmin[4:6, :]
    tmax = cmax[4:6, :]
    ov1 = jnp.maximum(jnp.minimum(cmax[0:2, :], tmax) - jnp.maximum(cmin[0:2, :], tmin), 0.0)
    ov2 = jnp.maximum(jnp.minimum(cmax[2:4, :], tmax) - jnp.maximum(cmin[2:4, :], tmin), 0.0)
    inter1 = ov1[0:1, :] * ov1[1:2, :]
    inter2 = ov2[0:1, :] * ov2[1:2, :]
    whc = cmax - cmin            # corner-derived extents (matches reference area math)
    a1 = jnp.abs(whc[0:1, :] * whc[1:2, :])
    a2 = jnp.abs(whc[2:3, :] * whc[3:4, :])
    at = jnp.abs(whc[4:5, :] * whc[5:6, :])
    den1 = a1 + at - inter1 + 1e-6
    den2 = a2 + at - inter2 + 1e-6
    # iou2 > iou1  <=>  inter2*den1 > inter1*den2  (denominators positive);
    # ties -> box 1, like torch.max over [iou1, iou2].
    best = (inter2 * den1 > inter1 * den2).astype(jnp.float32)   # (1,400)
    nbest = 1.0 - best

    # ---- box (coordinate) loss ---------------------------------------------
    sel_xy = best * xy[2:4, :] + nbest * xy[0:2, :]
    sel_wh = best * wh[2:4, :] + nbest * wh[0:2, :]
    xy_d = exists * (sel_xy - xy[4:6, :])                        # (2,400)
    # module verbatim: sign(sqrt(abs(x + 1e-6)))  ==  {0 if x+1e-6==0 else 1}
    bp_wh = jnp.where(jnp.abs(exists * sel_wh + 1e-6) > 0.0, 1.0, 0.0)
    wh_d = bp_wh - jnp.sqrt(exists * wh[4:6, :])
    box_sq = xy_d * xy_d + wh_d * wh_d                           # (2,400)
    box_row = box_sq[0:1, :] + box_sq[1:2, :]                    # (1,400)

    # ---- object / no-object loss (masks factored out of the diffs) ---------
    pred_box = best * conf2 + nbest * conf1
    obj_d = exists * (pred_box - exists)         # target[...,20:21] == exists
    ne = 1.0 - exists
    no1 = ne * (conf1 - exists)
    no2 = ne * (conf2 - exists)

    # ---- class loss (module's rank-3 broadcast; valid for N=1, S==C) -------
    cls_d = exists_bc * (conf1 - tcls)                           # (20,400)
    cls_row = jnp.sum(cls_d * cls_d, axis=0, keepdims=True)      # (1,400)

    acc_row = (LAMBDA_COORD * box_row + obj_d * obj_d
               + LAMBDA_NOOBJ * (no1 * no1 + no2 * no2) + cls_row)
    out_ref[0, 0] = jnp.sum(acc_row)


# --------------------------------------------------------------------------
# Wrapper: one static gather to build the pack, one gridless pallas_call
# --------------------------------------------------------------------------
@jax.jit
def yolo_loss(predictions, target):
    src = jnp.concatenate([
        predictions.astype(jnp.float32).reshape(-1),
        target.astype(jnp.float32).reshape(-1),
    ])
    pack = jnp.take(src, jnp.asarray(_PACK_IDX), axis=0, mode="clip")  # (56,400)

    out = pl.pallas_call(
        _yolo_loss_kernel,
        out_shape=jax.ShapeDtypeStruct((1, 1), jnp.float32),
        in_specs=[pl.BlockSpec(memory_space=pltpu.MemorySpace.VMEM)],
        out_specs=pl.BlockSpec(memory_space=pltpu.MemorySpace.SMEM),
        cost_estimate=pl.CostEstimate(
            flops=60_000,
            transcendentals=800,
            bytes_accessed=56 * NCELL * 4 + 4),
    )(pack)
    return out[0, 0]


# --------------------------------------------------------------------------
# Independent pure-JAX reference: literal transcription of the torch module
# (channels-last layout, literal division-based IoU, literal sign(sqrt(abs)),
# literal rank-3 class-loss broadcast) to catch kernel transcription bugs.
# --------------------------------------------------------------------------
def _iou_ref(bp, bl):
    b1x1 = bp[..., 0:1] - bp[..., 2:3] / 2
    b1y1 = bp[..., 1:2] - bp[..., 3:4] / 2
    b1x2 = bp[..., 0:1] + bp[..., 2:3] / 2
    b1y2 = bp[..., 1:2] + bp[..., 3:4] / 2
    b2x1 = bl[..., 0:1] - bl[..., 2:3] / 2
    b2y1 = bl[..., 1:2] - bl[..., 3:4] / 2
    b2x2 = bl[..., 0:1] + bl[..., 2:3] / 2
    b2y2 = bl[..., 1:2] + bl[..., 3:4] / 2
    x1 = jnp.maximum(b1x1, b2x1)
    y1 = jnp.maximum(b1y1, b2y1)
    x2 = jnp.minimum(b1x2, b2x2)
    y2 = jnp.minimum(b1y2, b2y2)
    inter = jnp.maximum(x2 - x1, 0.0) * jnp.maximum(y2 - y1, 0.0)
    a1 = jnp.abs((b1x2 - b1x1) * (b1y2 - b1y1))
    a2 = jnp.abs((b2x2 - b2x1) * (b2y2 - b2y1))
    return inter / (a1 + a2 - inter + 1e-6)


def _reference_loss(predictions, target):
    pred = predictions.reshape(-1, S, S, NCH)
    iou_b1 = _iou_ref(pred[..., 21:25], target[..., 21:25])
    iou_b2 = _iou_ref(pred[..., 26:30], target[..., 21:25])
    best_box = (iou_b2 > iou_b1).astype(pred.dtype)
    exists_box = target[..., 20:21]

    box_pred = exists_box * (best_box * pred[..., 26:30] + (1 - best_box) * pred[..., 21:25])
    box_targ = exists_box * target[..., 21:25]
    bp_wh = jnp.sign(jnp.sqrt(jnp.abs(box_pred[..., 2:4] + 1e-6)))
    bt_wh = jnp.sqrt(box_targ[..., 2:4])
    box_loss = (jnp.sum((box_pred[..., 0:2] - box_targ[..., 0:2]) ** 2)
                + jnp.sum((bp_wh - bt_wh) ** 2))

    pred_box = best_box * pred[..., 25:26] + (1 - best_box) * pred[..., 20:21]
    object_loss = jnp.sum((exists_box * pred_box - exists_box * target[..., 20:21]) ** 2)

    no_obj = jnp.sum(((1 - exists_box) * pred[..., 20:21]
                      - (1 - exists_box) * target[..., 20:21]) ** 2)
    no_obj = no_obj + jnp.sum(((1 - exists_box) * pred[..., 25:26]
                               - (1 - exists_box) * target[..., 20:21]) ** 2)

    cls_in = exists_box * pred[..., 20]     # rank-3 slice -> (1,S,S,S) broadcast (module quirk, kept)
    cls_tg = exists_box * target[..., :20]
    class_loss = jnp.sum((cls_in - cls_tg) ** 2)

    return (LAMBDA_COORD * box_loss + object_loss
            + LAMBDA_NOOBJ * no_obj + class_loss)


if __name__ == "__main__":
    key = jax.random.PRNGKey(0)
    kp, kt = jax.random.split(key)
    # predictions arrive flat, as the module's reshape(-1, S, S, C+5B) implies
    predictions = jax.random.uniform(kp, (N, S * S * NCH), dtype=jnp.float32)
    target = jax.random.uniform(kt, (N, S, S, NCH), dtype=jnp.float32)

    loss = yolo_loss(predictions, target)
    jax.block_until_ready(loss)

    ref = _reference_loss(predictions, target)
    assert jnp.isfinite(loss), loss
    assert jnp.allclose(loss, ref, rtol=1e-4, atol=1e-2), (float(loss), float(ref))

    print("KERNEL_OK")
</pallas_src>

<mosaic_0001>
module attributes {stable_mosaic.version = 11 : i64} {
  func.func @_yolo_loss_kernel(%arg0: memref<56x400xf32, #tpu.memory_space<vmem>>, %arg1: memref<1x1xf32, #tpu.memory_space<smem>>) attributes {dimension_semantics = [], scalar_prefetch = 0 : i64, scratch_operands = 0 : i64, tpu.core_type = #tpu.core_type<tc>} {
    %c0 = arith.constant 0 : index
    %c0_0 = arith.constant 0 : index
    %0 = vector.load %arg0[%c0, %c0_0] : memref<56x400xf32, #tpu.memory_space<vmem>>, vector<1x400xf32>
    %c1 = arith.constant 1 : index
    %c0_1 = arith.constant 0 : index
    %1 = vector.load %arg0[%c1, %c0_1] : memref<56x400xf32, #tpu.memory_space<vmem>>, vector<1x400xf32>
    %c2 = arith.constant 2 : index
    %c0_2 = arith.constant 0 : index
    %2 = vector.load %arg0[%c2, %c0_2] : memref<56x400xf32, #tpu.memory_space<vmem>>, vector<6x400xf32>
    %c8 = arith.constant 8 : index
    %c0_3 = arith.constant 0 : index
    %3 = vector.load %arg0[%c8, %c0_3] : memref<56x400xf32, #tpu.memory_space<vmem>>, vector<6x400xf32>
    %c14 = arith.constant 14 : index
    %c0_4 = arith.constant 0 : index
    %4 = vector.load %arg0[%c14, %c0_4] : memref<56x400xf32, #tpu.memory_space<vmem>>, vector<1x400xf32>
    %c16 = arith.constant 16 : index
    %c0_5 = arith.constant 0 : index
    %5 = vector.load %arg0[%c16, %c0_5] : memref<56x400xf32, #tpu.memory_space<vmem>>, vector<20x400xf32>
    %c36 = arith.constant 36 : index
    %c0_6 = arith.constant 0 : index
    %6 = vector.load %arg0[%c36, %c0_6] : memref<56x400xf32, #tpu.memory_space<vmem>>, vector<20x400xf32>
    %cst = arith.constant 5.000000e-01 : f32
    %7 = vector.broadcast %cst : f32 to vector<6x400xf32>
    %8 = arith.mulf %3, %7 : vector<6x400xf32>
    %9 = arith.subf %2, %8 : vector<6x400xf32>
    %10 = arith.addf %2, %8 : vector<6x400xf32>
    %11 = vector.extract_strided_slice %9 {offsets = [4, 0], sizes = [2, 400], strides = [1, 1]} : vector<6x400xf32> to vector<2x400xf32>
    %12 = vector.extract_strided_slice %10 {offsets = [4, 0], sizes = [2, 400], strides = [1, 1]} : vector<6x400xf32> to vector<2x400xf32>
    %13 = vector.extract_strided_slice %10 {offsets = [0, 0], sizes = [2, 400], strides = [1, 1]} : vector<6x400xf32> to vector<2x400xf32>
    %14 = arith.minimumf %13, %12 : vector<2x400xf32>
    %15 = vector.extract_strided_slice %9 {offsets = [0, 0], sizes = [2, 400], strides = [1, 1]} : vector<6x400xf32> to vector<2x400xf32>
    %16 = arith.maximumf %15, %11 : vector<2x400xf32>
    %17 = arith.subf %14, %16 : vector<2x400xf32>
    %cst_7 = arith.constant 0.000000e+00 : f32
    %18 = vector.broadcast %cst_7 : f32 to vector<2x400xf32>
    %19 = arith.maximumf %17, %18 : vector<2x400xf32>
    %20 = vector.extract_strided_slice %10 {offsets = [2, 0], sizes = [2, 400], strides = [1, 1]} : vector<6x400xf32> to vector<2x400xf32>
    %21 = arith.minimumf %20, %12 : vector<2x400xf32>
    %22 = vector.extract_strided_slice %9 {offsets = [2, 0], sizes = [2, 400], strides = [1, 1]} : vector<6x400xf32> to vector<2x400xf32>
    %23 = arith.maximumf %22, %11 : vector<2x400xf32>
    %24 = arith.subf %21, %23 : vector<2x400xf32>
    %cst_8 = arith.constant 0.000000e+00 : f32
    %25 = vector.broadcast %cst_8 : f32 to vector<2x400xf32>
    %26 = arith.maximumf %24, %25 : vector<2x400xf32>
    %27 = vector.extract_strided_slice %19 {offsets = [0, 0], sizes = [1, 400], strides = [1, 1]} : vector<2x400xf32> to vector<1x400xf32>
    %28 = vector.extract_strided_slice %19 {offsets = [1, 0], sizes = [1, 400], strides = [1, 1]} : vector<2x400xf32> to vector<1x400xf32>
    %29 = arith.mulf %27, %28 : vector<1x400xf32>
    %30 = vector.extract_strided_slice %26 {offsets = [0, 0], sizes = [1, 400], strides = [1, 1]} : vector<2x400xf32> to vector<1x400xf32>
    %31 = vector.extract_strided_slice %26 {offsets = [1, 0], sizes = [1, 400], strides = [1, 1]} : vector<2x400xf32> to vector<1x400xf32>
    %32 = arith.mulf %30, %31 : vector<1x400xf32>
    %33 = arith.subf %10, %9 : vector<6x400xf32>
    %34 = vector.extract_strided_slice %33 {offsets = [0, 0], sizes = [1, 400], strides = [1, 1]} : vector<6x400xf32> to vector<1x400xf32>
    %35 = vector.extract_strided_slice %33 {offsets = [1, 0], sizes = [1, 400], strides = [1, 1]} : vector<6x400xf32> to vector<1x400xf32>
    %36 = arith.mulf %34, %35 : vector<1x400xf32>
    %37 = math.absf %36 : vector<1x400xf32>
    %38 = vector.extract_strided_slice %33 {offsets = [2, 0], sizes = [1, 400], strides = [1, 1]} : vector<6x400xf32> to vector<1x400xf32>
    %39 = vector.extract_strided_slice %33 {offsets = [3, 0], sizes = [1, 400], strides = [1, 1]} : vector<6x400xf32> to vector<1x400xf32>
    %40 = arith.mulf %38, %39 : vector<1x400xf32>
    %41 = math.absf %40 : vector<1x400xf32>
    %42 = vector.extract_strided_slice %33 {offsets = [4, 0], sizes = [1, 400], strides = [1, 1]} : vector<6x400xf32> to vector<1x400xf32>
    %43 = vector.extract_strided_slice %33 {offsets = [5, 0], sizes = [1, 400], strides = [1, 1]} : vector<6x400xf32> to vector<1x400xf32>
    %44 = arith.mulf %42, %43 : vector<1x400xf32>
    %45 = math.absf %44 : vector<1x400xf32>
    %46 = arith.addf %37, %45 : vector<1x400xf32>
    %47 = arith.subf %46, %29 : vector<1x400xf32>
    %cst_9 = arith.constant 9.99999997E-7 : f32
    %48 = vector.broadcast %cst_9 : f32 to vector<1x400xf32>
    %49 = arith.addf %47, %48 : vector<1x400xf32>
    %50 = arith.addf %41, %45 : vector<1x400xf32>
    %51 = arith.subf %50, %32 : vector<1x400xf32>
    %cst_10 = arith.constant 9.99999997E-7 : f32
    %52 = vector.broadcast %cst_10 : f32 to vector<1x400xf32>
    %53 = arith.addf %51, %52 : vector<1x400xf32>
    %54 = arith.mulf %32, %49 : vector<1x400xf32>
    %55 = arith.mulf %29, %53 : vector<1x400xf32>
    %56 = arith.cmpf ogt, %54, %55 : vector<1x400xf32>
    %57 = arith.extui %56 : vector<1x400xi1> to vector<1x400xi32>
    %58 = arith.sitofp %57 : vector<1x400xi32> to vector<1x400xf32>
    %cst_11 = arith.constant 1.000000e+00 : f32
    %59 = vector.broadcast %cst_11 : f32 to vector<1x400xf32>
    %60 = arith.subf %59, %58 : vector<1x400xf32>
    %61 = vector.extract_strided_slice %2 {offsets = [2, 0], sizes = [2, 400], strides = [1, 1]} : vector<6x400xf32> to vector<2x400xf32>
    %62 = vector.broadcast %58 : vector<1x400xf32> to vector<2x400xf32>
    %63 = arith.mulf %62, %61 : vector<2x400xf32>
    %64 = vector.extract_strided_slice %2 {offsets = [0, 0], sizes = [2, 400], strides = [1, 1]} : vector<6x400xf32> to vector<2x400xf32>
    %65 = vector.broadcast %60 : vector<1x400xf32> to vector<2x400xf32>
    %66 = arith.mulf %65, %64 : vector<2x400xf32>
    %67 = arith.addf %63, %66 : vector<2x400xf32>
    %68 = vector.extract_strided_slice %3 {offsets = [2, 0], sizes = [2, 400], strides = [1, 1]} : vector<6x400xf32> to vector<2x400xf32>
    %69 = vector.broadcast %58 : vector<1x400xf32> to vector<2x400xf32>
    %70 = arith.mulf %69, %68 : vector<2x400xf32>
    %71 = vector.extract_strided_slice %3 {offsets = [0, 0], sizes = [2, 400], strides = [1, 1]} : vector<6x400xf32> to vector<2x400xf32>
    %72 = vector.broadcast %60 : vector<1x400xf32> to vector<2x400xf32>
    %73 = arith.mulf %72, %71 : vector<2x400xf32>
    %74 = arith.addf %70, %73 : vector<2x400xf32>
    %75 = vector.extract_strided_slice %2 {offsets = [4, 0], sizes = [2, 400], strides = [1, 1]} : vector<6x400xf32> to vector<2x400xf32>
    %76 = arith.subf %67, %75 : vector<2x400xf32>
    %77 = vector.broadcast %4 : vector<1x400xf32> to vector<2x400xf32>
    %78 = arith.mulf %77, %76 : vector<2x400xf32>
    %79 = vector.broadcast %4 : vector<1x400xf32> to vector<2x400xf32>
    %80 = arith.mulf %79, %74 : vector<2x400xf32>
    %cst_12 = arith.constant 9.99999997E-7 : f32
    %81 = vector.broadcast %cst_12 : f32 to vector<2x400xf32>
    %82 = arith.addf %80, %81 : vector<2x400xf32>
    %83 = math.absf %82 : vector<2x400xf32>
    %cst_13 = arith.constant 0.000000e+00 : f32
    %84 = vector.broadcast %cst_13 : f32 to vector<2x400xf32>
    %85 = arith.cmpf ogt, %83, %84 : vector<2x400xf32>
    %cst_14 = arith.constant 1.000000e+00 : f32
    %cst_15 = arith.constant 0.000000e+00 : f32
    %86 = vector.broadcast %cst_14 : f32 to vector<2x400xf32>
    %87 = vector.broadcast %cst_15 : f32 to vector<2x400xf32>
    %88 = arith.select %85, %86, %87 : vector<2x400xi1>, vector<2x400xf32>
    %89 = vector.extract_strided_slice %3 {offsets = [4, 0], sizes = [2, 400], strides = [1, 1]} : vector<6x400xf32> to vector<2x400xf32>
    %90 = vector.broadcast %4 : vector<1x400xf32> to vector<2x400xf32>
    %91 = arith.mulf %90, %89 : vector<2x400xf32>
    %92 = math.sqrt %91 : vector<2x400xf32>
    %93 = arith.subf %88, %92 : vector<2x400xf32>
    %94 = arith.mulf %78, %78 : vector<2x400xf32>
    %95 = arith.mulf %93, %93 : vector<2x400xf32>
    %96 = arith.addf %94, %95 : vector<2x400xf32>
    %97 = vector.extract_strided_slice %96 {offsets = [0, 0], sizes = [1, 400], strides = [1, 1]} : vector<2x400xf32> to vector<1x400xf32>
    %98 = vector.extract_strided_slice %96 {offsets = [1, 0], sizes = [1, 400], strides = [1, 1]} : vector<2x400xf32> to vector<1x400xf32>
    %99 = arith.addf %97, %98 : vector<1x400xf32>
    %100 = arith.mulf %58, %1 : vector<1x400xf32>
    %101 = arith.mulf %60, %0 : vector<1x400xf32>
    %102 = arith.addf %100, %101 : vector<1x400xf32>
    %103 = arith.subf %102, %4 : vector<1x400xf32>
    %104 = arith.mulf %4, %103 : vector<1x400xf32>
    %cst_16 = arith.constant 1.000000e+00 : f32
    %105 = vector.broadcast %cst_16 : f32 to vector<1x400xf32>
    %106 = arith.subf %105, %4 : vector<1x400xf32>
    %107 = arith.subf %0, %4 : vector<1x400xf32>
    %108 = arith.mulf %106, %107 : vector<1x400xf32>
    %109 = arith.subf %1, %4 : vector<1x400xf32>
    %110 = arith.mulf %106, %109 : vector<1x400xf32>
    %111 = vector.broadcast %0 : vector<1x400xf32> to vector<20x400xf32>
    %112 = arith.subf %111, %5 : vector<20x400xf32>
    %113 = arith.mulf %6, %112 : vector<20x400xf32>
    %114 = arith.mulf %113, %113 : vector<20x400xf32>
    %cst_17 = arith.constant dense<0.000000e+00> : vector<400xf32>
    %115 = vector.multi_reduction <add>, %114, %cst_17 [0] : vector<20x400xf32> to vector<400xf32>
    %116 = vector.shape_cast %115 : vector<400xf32> to vector<1x400xf32>
    %cst_18 = arith.constant 5.000000e+00 : f32
    %117 = vector.broadcast %cst_18 : f32 to vector<1x400xf32>
    %118 = arith.mulf %117, %99 : vector<1x400xf32>
    %119 = arith.mulf %104, %104 : vector<1x400xf32>
    %120 = arith.addf %118, %119 : vector<1x400xf32>
    %121 = arith.mulf %108, %108 : vector<1x400xf32>
    %122 = arith.mulf %110, %110 : vector<1x400xf32>
    %123 = arith.addf %121, %122 : vector<1x400xf32>
    %cst_19 = arith.constant 5.000000e-01 : f32
    %124 = vector.broadcast %cst_19 : f32 to vector<1x400xf32>
    %125 = arith.mulf %124, %123 : vector<1x400xf32>
    %126 = arith.addf %120, %125 : vector<1x400xf32>
    %127 = arith.addf %126, %116 : vector<1x400xf32>
    %128 = vector.shape_cast %127 : vector<1x400xf32> to vector<1x1x400xf32>
    %cst_20 = arith.constant dense<0.000000e+00> : vector<1xf32>
    %129 = vector.multi_reduction <add>, %128, %cst_20 [1, 2] : vector<1x1x400xf32> to vector<1xf32>
    %130 = vector.shape_cast %129 : vector<1xf32> to vector<1x1x1xf32>
    %131 = vector.extract %130[0, 0, 0] : f32 from vector<1x1x1xf32>
    %c0_21 = arith.constant 0 : index
    %c0_22 = arith.constant 0 : index
    %132 = memref.load %arg1[%c0_21, %c0_22] : memref<1x1xf32, #tpu.memory_space<smem>>
    memref.store %131, %arg1[%c0_21, %c0_22] : memref<1x1xf32, #tpu.memory_space<smem>>
    return
  }
}

</mosaic_0001>

<llo_original>
// kernel: yolo_loss.1
$region0: #{yolo_loss.1}
  #allocation0 [shape = 'u32[]', space=smem, size = 0x4, offset = 0x4, fixed_abs, tag = 'smem constant byte address 0x4 - core index']
  #allocation1 [shape = 'u32[72,128]{1,0:T(1,128)}', space=vmem, size = 0x9000, scoped, tag = 'internal scratch']
  %s0 = inlined_call_operand.vmem [shape: f32[56,400], index: 0, kind: input, shape index: {}]
  %s1 = inlined_call_operand.hbm [shape: f32[1,1], index: 1, kind: output, shape index: {}]
  %s2 = sld [smem:[#allocation0]]
  $region14: #{yolo_loss.1} parent=0
    _
  %s4 = ssub.s32 1, %s2
  %s5 = scalar_select 0, %s4, %s2
  $region1: #{yolo_loss.1} parent=0
    #allocation2 [shape = 'u8[512]{0}', space=smem, size = 0x200, scoped, tag = 'output window, operand 0, single buffered']
    #allocation3 [shape = 's32[1]{0}', space=sflag, size = 0x4, scoped, tag = 'scoped memory for yolo_loss.1']
    %6 = vsyncpa [#allocation3], 0
    // Predicated region
    $region2: #{yolo_loss.1} parent=1 // pred_check
      _
    $region3: #{yolo_loss.1} parent=1 // pred_check_branch
      %8 = sbr.rel (0) target = $region5
    $region4: #{yolo_loss.1} parent=1 // pred_region
      _
    $region5: #{yolo_loss.1} parent=1 // pred_fallthru
      _
    %v9 = vld [vmem:[%s0] ss:$8 sm:$0xf]
    %s10 = scalar_lea.vmem %s0, 1
    %v11 = vld [vmem:[%s10] ss:$8 sm:$0xf]
    %v12 = vld [vmem:[%s0] sm:$0xfc]
    %v13 = vld [vmem:[%s0 + $0x8] sm:$0xfc]
    %v14 = vld [vmem:[%s0 + $0x10] sm:$0xfc]
    %v15 = vld [vmem:[%s0 + $0x18] sm:$0xfc]
    %v16 = vld [vmem:[%s0 + $0x20] sm:$0x3f]
    %v17 = vld [vmem:[%s0 + $0x28] sm:$0x3f]
    %v18 = vld [vmem:[%s0 + $0x30] sm:$0x3f]
    %v19 = vld [vmem:[%s0 + $0x38] sm:$0x3f]
    %s20 = scalar_lea.vmem %s0, 38
    %v21 = vld [vmem:[%s20] ss:$8 sm:$0xf]
    %v22 = vld [vmem:[%s0 + $0x40] sm:$0xff]
    %v23 = vld [vmem:[%s0 + $0x48] sm:$0xff]
    %v24 = vld [vmem:[%s0 + $0x50] sm:$0xff]
    %v25 = vld [vmem:[%s0 + $0x58] sm:$0xff]
    %v26 = vld [vmem:[%s0 + $0x60] sm:$0xff]
    %v27 = vld [vmem:[%s0 + $0x68] sm:$0xff]
    %v28 = vld [vmem:[%s0 + $0x70] sm:$0xff]
    %v29 = vld [vmem:[%s0 + $0x78] sm:$0xff]
    %v30 = vld [vmem:[%s0 + $0x80] sm:$0xf]
    %v31 = vld [vmem:[%s0 + $0x88] sm:$0xf]
    %v32 = vld [vmem:[%s0 + $0x90] sm:$0xf]
    %v33 = vld [vmem:[%s0 + $0x98] sm:$0xf]
    %v34 = vld [vmem:[%s0 + $0x80] sm:$0xf0]
    %v35 = vld [vmem:[%s0 + $0x88] sm:$0xf0]
    %v36 = vld [vmem:[%s0 + $0x90] sm:$0xf0]
    %v37 = vld [vmem:[%s0 + $0x98] sm:$0xf0]
    %v38 = vld [vmem:[%s0 + $0xa0] sm:$0xff]
    %v39 = vld [vmem:[%s0 + $0xa8] sm:$0xff]
    %v40 = vld [vmem:[%s0 + $0xb0] sm:$0xff]
    %v41 = vld [vmem:[%s0 + $0xb8] sm:$0xff]
    %v42 = vld [vmem:[%s0 + $0xc0] sm:$0xff]
    %v43 = vld [vmem:[%s0 + $0xc8] sm:$0xff]
    %v44 = vld [vmem:[%s0 + $0xd0] sm:$0xff]
    %v45 = vld [vmem:[%s0 + $0xd8] sm:$0xff]
    %v46 = vmul.f32 %v16, 0.5
    %v47 = vmul.f32 %v17, 0.5
    %v48 = vmul.f32 %v18, 0.5
    %v49 = vmul.f32 %v19, 0.5
    %v54 = vrot.slane %v46, 6
    %v55 = vrot.slane %v47, 6
    %v56 = vrot.slane %v48, 6
    %v57 = vrot.slane %v49, 6
    %v62 = vsub.f32 %v12, %v54
    %v63 = vsub.f32 %v13, %v55
    %v64 = vsub.f32 %v14, %v56
    %v65 = vsub.f32 %v15, %v57
    %v66 = vadd.f32 %v12, %v54
    %v67 = vadd.f32 %v13, %v55
    %v68 = vadd.f32 %v14, %v56
    %v69 = vadd.f32 %v15, %v57
    %v74 = vrot.slane %v66, 4
    %v75 = vrot.slane %v67, 4
    %v76 = vrot.slane %v68, 4
    %v77 = vrot.slane %v69, 4
    %v82 = vmin.f32 %v66, %v74
    %v83 = vmin.f32 %v67, %v75
    %v84 = vmin.f32 %v68, %v76
    %v85 = vmin.f32 %v69, %v77
    %v90 = vrot.slane %v62, 4
    %v91 = vrot.slane %v63, 4
    %v92 = vrot.slane %v64, 4
    %v93 = vrot.slane %v65, 4
    %v98 = vmax.f32 %v62, %v90
    %v99 = vmax.f32 %v63, %v91
    %v100 = vmax.f32 %v64, %v92
    %v101 = vmax.f32 %v65, %v93
    %v102 = vsub.f32 %v82, %v98
    %v103 = vsub.f32 %v83, %v99
    %v104 = vsub.f32 %v84, %v100
    %v105 = vsub.f32 %v85, %v101
    %v106 = vmax.f32 %v102, 0.0
    %v107 = vmax.f32 %v103, 0.0
    %v108 = vmax.f32 %v104, 0.0
    %v109 = vmax.f32 %v105, 0.0
    %v110 = vrot.slane %v66, 2
    %v111 = vrot.slane %v67, 2
    %v112 = vrot.slane %v68, 2
    %v113 = vrot.slane %v69, 2
    %v118 = vmin.f32 %v66, %v110
    %v119 = vmin.f32 %v67, %v111
    %v120 = vmin.f32 %v68, %v112
    %v121 = vmin.f32 %v69, %v113
    %v122 = vrot.slane %v62, 2
    %v123 = vrot.slane %v63, 2
    %v124 = vrot.slane %v64, 2
    %v125 = vrot.slane %v65, 2
    %v130 = vmax.f32 %v62, %v122
    %v131 = vmax.f32 %v63, %v123
    %v132 = vmax.f32 %v64, %v124
    %v133 = vmax.f32 %v65, %v125
    %v134 = vsub.f32 %v118, %v130
    %v135 = vsub.f32 %v119, %v131
    %v136 = vsub.f32 %v120, %v132
    %v137 = vsub.f32 %v121, %v133
    %v138 = vmax.f32 %v134, 0.0
    %v139 = vmax.f32 %v135, 0.0
    %v140 = vmax.f32 %v136, 0.0
    %v141 = vmax.f32 %v137, 0.0
    %v146 = vrot.slane %v106, 1
    %v147 = vrot.slane %v107, 1
    %v148 = vrot.slane %v108, 1
    %v149 = vrot.slane %v109, 1
    %v154 = vmul.f32 %v106, %v146
    %v155 = vmul.f32 %v107, %v147
    %v156 = vmul.f32 %v108, %v148
    %v157 = vmul.f32 %v109, %v149
    %v162 = vrot.slane %v138, 1
    %v163 = vrot.slane %v139, 1
    %v164 = vrot.slane %v140, 1
    %v165 = vrot.slane %v141, 1
    %v170 = vmul.f32 %v138, %v162
    %v171 = vmul.f32 %v139, %v163
    %v172 = vmul.f32 %v140, %v164
    %v173 = vmul.f32 %v141, %v165
    %v174 = vsub.f32 %v66, %v62
    %v175 = vsub.f32 %v67, %v63
    %v176 = vsub.f32 %v68, %v64
    %v177 = vsub.f32 %v69, %v65
    %v182 = vrot.slane %v174, 1
    %v183 = vrot.slane %v175, 1
    %v184 = vrot.slane %v176, 1
    %v185 = vrot.slane %v177, 1
    %v190 = vmul.f32 %v174, %v182
    %v191 = vmul.f32 %v175, %v183
    %v192 = vmul.f32 %v176, %v184
    %v193 = vmul.f32 %v177, %v185
    %v194 = vand.u32 2147483647, %v190
    %v195 = vand.u32 2147483647, %v191
    %v196 = vand.u32 2147483647, %v192
    %v197 = vand.u32 2147483647, %v193
    %v202 = vrot.slane %v194, 4
    %v203 = vrot.slane %v195, 4
    %v204 = vrot.slane %v196, 4
    %v205 = vrot.slane %v197, 4
    %v210 = vadd.f32 %v194, %v202
    %v211 = vadd.f32 %v195, %v203
    %v212 = vadd.f32 %v196, %v204
    %v213 = vadd.f32 %v197, %v205
    %v214 = vsub.f32 %v210, %v154
    %v215 = vsub.f32 %v211, %v155
    %v216 = vsub.f32 %v212, %v156
    %v217 = vsub.f32 %v213, %v157
    %v218 = vadd.f32 %v214, 1e-06
    %v219 = vadd.f32 %v215, 1e-06
    %v220 = vadd.f32 %v216, 1e-06
    %v221 = vadd.f32 %v217, 1e-06
    %v222 = vrot.slane %v194, 2
    %v223 = vrot.slane %v195, 2
    %v224 = vrot.slane %v196, 2
    %v225 = vrot.slane %v197, 2
    %v230 = vadd.f32 %v194, %v222
    %v231 = vadd.f32 %v195, %v223
    %v232 = vadd.f32 %v196, %v224
    %v233 = vadd.f32 %v197, %v225
    %v234 = vsub.f32 %v230, %v170
    %v235 = vsub.f32 %v231, %v171
    %v236 = vsub.f32 %v232, %v172
    %v237 = vsub.f32 %v233, %v173
    %v238 = vadd.f32 %v234, 1e-06
    %v239 = vadd.f32 %v235, 1e-06
    %v240 = vadd.f32 %v236, 1e-06
    %v241 = vadd.f32 %v237, 1e-06
    %v246 = vrot.slane %v218, 6
    %v247 = vrot.slane %v219, 6
    %v248 = vrot.slane %v220, 6
    %v249 = vrot.slane %v221, 6
    %v254 = vmul.f32 %v170, %v246
    %v255 = vmul.f32 %v171, %v247
    %v256 = vmul.f32 %v172, %v248
    %v257 = vmul.f32 %v173, %v249
    %v262 = vrot.slane %v238, 2
    %v263 = vrot.slane %v239, 2
    %v264 = vrot.slane %v240, 2
    %v265 = vrot.slane %v241, 2
    %v270 = vmul.f32 %v154, %v262
    %v271 = vmul.f32 %v155, %v263
    %v272 = vmul.f32 %v156, %v264
    %v273 = vmul.f32 %v157, %v265
    %v278 = vrot.slane %v270, 6
    %v279 = vrot.slane %v271, 6
    %v280 = vrot.slane %v272, 6
    %v281 = vrot.slane %v273, 6
    %vm286 = vcmp.gt.f32.partialorder %v254, %v278
    %vm287 = vcmp.gt.f32.partialorder %v255, %v279
    %vm288 = vcmp.gt.f32.partialorder %v256, %v280
    %vm289 = vcmp.gt.f32.partialorder %v257, %v281
    %v290 = vsel %vm286, 1, 0
    %v291 = vsel %vm287, 1, 0
    %v292 = vsel %vm288, 1, 0
    %v293 = vsel %vm289, 1, 0
    %v294 = vcvt.s32.f32 %v290
    %v295 = vcvt.s32.f32 %v291
    %v296 = vcvt.s32.f32 %v292
    %v297 = vcvt.s32.f32 %v293
    %v298 = vsub.f32 1.0, %v294
    %v299 = vsub.f32 1.0, %v295
    %v300 = vsub.f32 1.0, %v296
    %v301 = vsub.f32 1.0, %v297
    %v302 = vperm.slane %v294, 4
    %v303 = vperm.slane %v295, 4
    %v304 = vperm.slane %v296, 4
    %v305 = vperm.slane %v297, 4
    %v306 = vmul.f32 %v302, %v12
    %v307 = vmul.f32 %v303, %v13
    %v308 = vmul.f32 %v304, %v14
    %v309 = vmul.f32 %v305, %v15
    %v310 = vperm.slane %v298, 4
    %v311 = vperm.slane %v299, 4
    %v312 = vperm.slane %v300, 4
    %v313 = vperm.slane %v301, 4
    %v314 = vmul.f32 %v310, %v12
    %v315 = vmul.f32 %v311, %v13
    %v316 = vmul.f32 %v312, %v14
    %v317 = vmul.f32 %v313, %v15
    %v322 = vrot.slane %v314, 6
    %v323 = vrot.slane %v315, 6
    %v324 = vrot.slane %v316, 6
    %v325 = vrot.slane %v317, 6
    %v330 = vadd.f32 %v306, %v322
    %v331 = vadd.f32 %v307, %v323
    %v332 = vadd.f32 %v308, %v324
    %v333 = vadd.f32 %v309, %v325
    %v334 = vmul.f32 %v302, %v16
    %v335 = vmul.f32 %v303, %v17
    %v336 = vmul.f32 %v304, %v18
    %v337 = vmul.f32 %v305, %v19
    %v338 = vmul.f32 %v310, %v16
    %v339 = vmul.f32 %v311, %v17
    %v340 = vmul.f32 %v312, %v18
    %v341 = vmul.f32 %v313, %v19
    %v346 = vrot.slane %v338, 6
    %v347 = vrot.slane %v339, 6
    %v348 = vrot.slane %v340, 6
    %v349 = vrot.slane %v341, 6
    %v354 = vadd.f32 %v334, %v346
    %v355 = vadd.f32 %v335, %v347
    %v356 = vadd.f32 %v336, %v348
    %v357 = vadd.f32 %v337, %v349
    %v362 = vrot.slane %v12, 2
    %v363 = vrot.slane %v13, 2
    %v364 = vrot.slane %v14, 2
    %v365 = vrot.slane %v15, 2
    %v370 = vsub.f32 %v330, %v362
    %v371 = vsub.f32 %v331, %v363
    %v372 = vsub.f32 %v332, %v364
    %v373 = vsub.f32 %v333, %v365
    %v375 = vperm.slane %v21, 0
    %v376 = vperm.slane %v21, 1
    %v377 = vperm.slane %v21, 2
    %v378 = vperm.slane %v21, 3
    %v383 = vmul.f32 %v375, %v370
    %v384 = vmul.f32 %v376, %v371
    %v385 = vmul.f32 %v377, %v372
    %v386 = vmul.f32 %v378, %v373
    %v387 = vmul.f32 %v375, %v354
    %v388 = vmul.f32 %v376, %v355
    %v389 = vmul.f32 %v377, %v356
    %v390 = vmul.f32 %v378, %v357
    %v391 = vadd.f32 %v387, 1e-06
    %v392 = vadd.f32 %v388, 1e-06
    %v393 = vadd.f32 %v389, 1e-06
    %v394 = vadd.f32 %v390, 1e-06
    %v395 = vand.u32 2147483647, %v391
    %v396 = vand.u32 2147483647, %v392
    %v397 = vand.u32 2147483647, %v393
    %v398 = vand.u32 2147483647, %v394
    %vm399 = vcmp.gt.f32.partialorder %v395, 0.0
    %vm400 = vcmp.gt.f32.partialorder %v396, 0.0
    %vm401 = vcmp.gt.f32.partialorder %v397, 0.0
    %vm402 = vcmp.gt.f32.partialorder %v398, 0.0
    %v403 = vsel %vm399, 1.0, 0.0
    %v404 = vsel %vm400, 1.0, 0.0
    %v405 = vsel %vm401, 1.0, 0.0
    %v406 = vsel %vm402, 1.0, 0.0
    %v407 = vmul.f32 %v375, %v16
    %v408 = vmul.f32 %v376, %v17
    %v409 = vmul.f32 %v377, %v18
    %v410 = vmul.f32 %v378, %v19
    %v411 = vrsqrt.pop %v407
    %v412 = vmul.f32 %v411, %v407
    %v413 = vmul.f32 %v412, %v411
    %v414 = vmul.f32 0.5, %v413
    %v415 = vsub.f32 1.5, %v414
    %v416 = vmul.f32 %v411, %v415
    %v417 = vmul.f32 %v407, %v416
    %vm418 = vcmp.eq.f32.partialorder %v407, inf
    %v419 = vsel %vm418, %v407, %v417
    %vm420 = vcmp.eq.f32.partialorder %v407, 0.0
    %v421 = vand.u32 %v407, 2147483648
    %v422 = vsel %vm420, %v421, %v419
    %v423 = vrsqrt.pop %v408
    %v424 = vmul.f32 %v423, %v408
    %v425 = vmul.f32 %v424, %v423
    %v426 = vmul.f32 0.5, %v425
    %v427 = vsub.f32 1.5, %v426
    %v428 = vmul.f32 %v423, %v427
    %v429 = vmul.f32 %v408, %v428
    %vm430 = vcmp.eq.f32.partialorder %v408, inf
    %v431 = vsel %vm430, %v408, %v429
    %vm432 = vcmp.eq.f32.partialorder %v408, 0.0
    %v433 = vand.u32 %v408, 2147483648
    %v434 = vsel %vm432, %v433, %v431
    %v435 = vrsqrt.pop %v409
    %v436 = vmul.f32 %v435, %v409
    %v437 = vmul.f32 %v436, %v435
    %v438 = vmul.f32 0.5, %v437
    %v439 = vsub.f32 1.5, %v438
    %v440 = vmul.f32 %v435, %v439
    %v441 = vmul.f32 %v409, %v440
    %vm442 = vcmp.eq.f32.partialorder %v409, inf
    %v443 = vsel %vm442, %v409, %v441
    %vm444 = vcmp.eq.f32.partialorder %v409, 0.0
    %v445 = vand.u32 %v409, 2147483648
    %v446 = vsel %vm444, %v445, %v443
    %v447 = vrsqrt.pop %v410
    %v448 = vmul.f32 %v447, %v410
    %v449 = vmul.f32 %v448, %v447
    %v450 = vmul.f32 0.5, %v449
    %v451 = vsub.f32 1.5, %v450
    %v452 = vmul.f32 %v447, %v451
    %v453 = vmul.f32 %v410, %v452
    %vm454 = vcmp.eq.f32.partialorder %v410, inf
    %v455 = vsel %vm454, %v410, %v453
    %vm456 = vcmp.eq.f32.partialorder %v410, 0.0
    %v457 = vand.u32 %v410, 2147483648
    %v458 = vsel %vm456, %v457, %v455
    %v463 = vrot.slane %v422, 2
    %v464 = vrot.slane %v434, 2
    %v465 = vrot.slane %v446, 2
    %v466 = vrot.slane %v458, 2
    %v471 = vsub.f32 %v403, %v463
    %v472 = vsub.f32 %v404, %v464
    %v473 = vsub.f32 %v405, %v465
    %v474 = vsub.f32 %v406, %v466
    %v475 = vmul.f32 %v383, %v383
    %v476 = vmul.f32 %v384, %v384
    %v477 = vmul.f32 %v385, %v385
    %v478 = vmul.f32 %v386, %v386
    %v479 = vmul.f32 %v471, %v471
    %v480 = vmul.f32 %v472, %v472
    %v481 = vmul.f32 %v473, %v473
    %v482 = vmul.f32 %v474, %v474
    %v487 = vrot.slane %v479, 6
    %v488 = vrot.slane %v480, 6
    %v489 = vrot.slane %v481, 6
    %v490 = vrot.slane %v482, 6
    %v495 = vadd.f32 %v475, %v487
    %v496 = vadd.f32 %v476, %v488
    %v497 = vadd.f32 %v477, %v489
    %v498 = vadd.f32 %v478, %v490
    %v503 = vrot.slane %v495, 1
    %v504 = vrot.slane %v496, 1
    %v505 = vrot.slane %v497, 1
    %v506 = vrot.slane %v498, 1
    %v511 = vadd.f32 %v495, %v503
    %v512 = vadd.f32 %v496, %v504
    %v513 = vadd.f32 %v497, %v505
    %v514 = vadd.f32 %v498, %v506
    %v516 = vperm.slane %v11, 0
    %v517 = vperm.slane %v11, 1
    %v518 = vperm.slane %v11, 2
    %v519 = vperm.slane %v11, 3
    %v524 = vmul.f32 %v294, %v516
    %v525 = vmul.f32 %v295, %v517
    %v526 = vmul.f32 %v296, %v518
    %v527 = vmul.f32 %v297, %v519
    %v529 = vperm.slane %v9, 0
    %v530 = vperm.slane %v9, 1
    %v531 = vperm.slane %v9, 2
    %v532 = vperm.slane %v9, 3
    %v537 = vmul.f32 %v298, %v529
    %v538 = vmul.f32 %v299, %v530
    %v539 = vmul.f32 %v300, %v531
    %v540 = vmul.f32 %v301, %v532
    %v541 = vadd.f32 %v524, %v537
    %v542 = vadd.f32 %v525, %v538
    %v543 = vadd.f32 %v526, %v539
    %v544 = vadd.f32 %v527, %v540
    %v545 = vsub.f32 %v541, %v375
    %v546 = vsub.f32 %v542, %v376
    %v547 = vsub.f32 %v543, %v377
    %v548 = vsub.f32 %v544, %v378
    %553 = vst [vmem:[#allocation1] sm:$0xff] %v545
    %554 = vst [vmem:[#allocation1 + $0x9] sm:$0xff] %v546
    %555 = vst [vmem:[#allocation1 + $0x12] sm:$0xff] %v547
    %556 = vst [vmem:[#allocation1 + $0x1b] sm:$0xff] %v548
    %s557 = scalar_lea.vmem [#allocation1], 4
    %v558 = vld [vmem:[%s557] ss:$9 sm:$0xff]
    %v560 = vmul.f32 %v21, %v558
    %v561 = vsub.f32 1.0, %v21
    %v562 = vsub.f32 %v9, %v21
    %v563 = vmul.f32 %v561, %v562
    %v564 = vsub.f32 %v11, %v21
    %v565 = vmul.f32 %v561, %v564
    %v566 = vsub.f32 %v529, %v22
    %v567 = vsub.f32 %v530, %v23
    %v568 = vsub.f32 %v531, %v24
    %v569 = vsub.f32 %v532, %v25
    %v570 = vsub.f32 %v529, %v26
    %v571 = vsub.f32 %v530, %v27
    %v572 = vsub.f32 %v531, %v28
    %v573 = vsub.f32 %v532, %v29
    %v574 = vsub.f32 %v529, %v30
    %v575 = vsub.f32 %v530, %v31
    %v576 = vsub.f32 %v531, %v32
    %v577 = vsub.f32 %v532, %v33
    %vm590 = vcmask 1043456
    %v591 = vrot.slane %v566, 4
    %v592 = vrot.slane %v567, 4
    %v593 = vrot.slane %v568, 4
    %v594 = vrot.slane %v569, 4
    %v595 = vrot.slane %v570, 4
    %v596 = vsel %vm590, %v591, %v595
    %v597 = vrot.slane %v571, 4
    %v598 = vsel %vm590, %v592, %v597
    %v599 = vrot.slane %v572, 4
    %v600 = vsel %vm590, %v593, %v599
    %v601 = vrot.slane %v573, 4
    %v602 = vsel %vm590, %v594, %v601
    %v603 = vrot.slane %v574, 4
    %v604 = vsel %vm590, %v595, %v603
    %v605 = vrot.slane %v575, 4
    %v606 = vsel %vm590, %v597, %v605
    %v607 = vrot.slane %v576, 4
    %v608 = vsel %vm590, %v599, %v607
    %v609 = vrot.slane %v577, 4
    %v610 = vsel %vm590, %v601, %v609
    %v623 = vmul.f32 %v34, %v591
    %v624 = vmul.f32 %v35, %v592
    %v625 = vmul.f32 %v36, %v593
    %v626 = vmul.f32 %v37, %v594
    %v627 = vmul.f32 %v38, %v596
    %v628 = vmul.f32 %v39, %v598
    %v629 = vmul.f32 %v40, %v600
    %v630 = vmul.f32 %v41, %v602
    %v631 = vmul.f32 %v42, %v604
    %v632 = vmul.f32 %v43, %v606
    %v633 = vmul.f32 %v44, %v608
    %v634 = vmul.f32 %v45, %v610
    %v635 = vmul.f32 %v623, %v623
    %v636 = vmul.f32 %v624, %v624
    %v637 = vmul.f32 %v625, %v625
    %v638 = vmul.f32 %v626, %v626
    %v639 = vmul.f32 %v627, %v627
    %v640 = vmul.f32 %v628, %v628
    %v641 = vmul.f32 %v629, %v629
    %v642 = vmul.f32 %v630, %v630
    %v643 = vmul.f32 %v631, %v631
    %v644 = vmul.f32 %v632, %v632
    %v645 = vmul.f32 %v633, %v633
    %v646 = vmul.f32 %v634, %v634
    %v659 = vrot.slane %v635, 4
    %v660 = vrot.slane %v639, 4
    %v661 = vsel %vm590, %v659, %v660
    %v662 = vrot.slane %v636, 4
    %v663 = vrot.slane %v640, 4
    %v664 = vsel %vm590, %v662, %v663
    %v665 = vrot.slane %v637, 4
    %v666 = vrot.slane %v641, 4
    %v667 = vsel %vm590, %v665, %v666
    %v668 = vrot.slane %v638, 4
    %v669 = vrot.slane %v642, 4
    %v670 = vsel %vm590, %v668, %v669
    %v671 = vrot.slane %v643, 4
    %v672 = vsel %vm590, %v660, %v671
    %v673 = vrot.slane %v644, 4
    %v674 = vsel %vm590, %v663, %v673
    %v675 = vrot.slane %v645, 4
    %v676 = vsel %vm590, %v666, %v675
    %v677 = vrot.slane %v646, 4
    %v678 = vsel %vm590, %v669, %v677
    %v691 = vadd.f32 %v661, %v672
    %v692 = vsel %vm590, %v671, 0.0
    %v693 = vadd.f32 %v691, %v692
    %v694 = vrot.slane %v693, 4
    %v695 = vadd.f32 %v693, %v694
    %v696 = vrot.slane %v695, 2
    %v697 = vadd.f32 %v695, %v696
    %v698 = vrot.slane %v697, 1
    %v699 = vadd.f32 %v697, %v698
    %v700 = vadd.f32 %v664, %v674
    %v701 = vsel %vm590, %v673, 0.0
    %v702 = vadd.f32 %v700, %v701
    %v703 = vrot.slane %v702, 4
    %v704 = vadd.f32 %v702, %v703
    %v705 = vrot.slane %v704, 2
    %v706 = vadd.f32 %v704, %v705
    %v707 = vrot.slane %v706, 1
    %v708 = vadd.f32 %v706, %v707
    %v709 = vadd.f32 %v667, %v676
    %v710 = vsel %vm590, %v675, 0.0
    %v711 = vadd.f32 %v709, %v710
    %v712 = vrot.slane %v711, 4
    %v713 = vadd.f32 %v711, %v712
    %v714 = vrot.slane %v713, 2
    %v715 = vadd.f32 %v713, %v714
    %v716 = vrot.slane %v715, 1
    %v717 = vadd.f32 %v715, %v716
    %vm718 = vcmask 130048
    %v719 = vsel %vm718, %v670, 0.0
    %v720 = vsel %vm718, %v678, 0.0
    %v721 = vadd.f32 %v719, %v720
    %vm722 = vcmask 125952
    %v723 = vsel %vm722, %v677, 0.0
    %v724 = vadd.f32 %v721, %v723
    %v725 = vrot.slane %v724, 4
    %v726 = vadd.f32 %v724, %v725
    %v727 = vrot.slane %v726, 2
    %v728 = vadd.f32 %v726, %v727
    %v729 = vrot.slane %v728, 1
    %v730 = vadd.f32 %v728, %v729
    %v731 = vmul.f32 %v511, 5.0
    %v732 = vmul.f32 %v512, 5.0
    %v733 = vmul.f32 %v513, 5.0
    %v734 = vmul.f32 %v514, 5.0
    %v735 = vmul.f32 %v560, %v560
    %v737 = vperm.slane %v735, 0
    %v738 = vperm.slane %v735, 1
    %v739 = vperm.slane %v735, 2
    %v740 = vperm.slane %v735, 3
    %v745 = vadd.f32 %v731, %v737
    %v746 = vadd.f32 %v732, %v738
    %v747 = vadd.f32 %v733, %v739
    %v748 = vadd.f32 %v734, %v740
    %v749 = vmul.f32 %v563, %v563
    %v750 = vmul.f32 %v565, %v565
    %v751 = vadd.f32 %v749, %v750
    %v752 = vmul.f32 %v751, 0.5
    %v754 = vperm.slane %v752, 0
    %v755 = vperm.slane %v752, 1
    %v756 = vperm.slane %v752, 2
    %v757 = vperm.slane %v752, 3
    %v762 = vadd.f32 %v745, %v754
    %v763 = vadd.f32 %v746, %v755
    %v764 = vadd.f32 %v747, %v756
    %v765 = vadd.f32 %v748, %v757
    %v766 = vadd.f32 %v762, %v699
    %v767 = vadd.f32 %v763, %v708
    %v768 = vadd.f32 %v764, %v717
    %v769 = vadd.f32 %v765, %v730
    %v774 = vrot.slane %v766, 4
    %v775 = vrot.slane %v767, 4
    %v776 = vrot.slane %v768, 4
    %v777 = vrot.slane %v769, 4
    %vm782 = vcmask 1040384
    %v783 = vsel %vm782, %v774, 0.0
    %v784 = vsel %vm782, %v775, 0.0
    %v785 = vadd.f32 %v783, %v784
    %v786 = vsel %vm782, %v776, 0.0
    %v787 = vadd.f32 %v785, %v786
    %vm788 = vcmask 122880
    %v789 = vsel %vm788, %v777, 0.0
    %v790 = vadd.f32 %v787, %v789
    %791 = vadd.xlane.f32.xlu0 %v790
    %v792 = vpop.xlane.xlu0 %791
    %v793 = vrot.slane %v792, 4
    %v794 = vadd.f32 %v792, %v793
    %v795 = vrot.slane %v794, 2
    %v796 = vadd.f32 %v794, %v795
    %v797 = vrot.slane %v796, 1
    %v798 = vadd.f32 %v796, %v797
    %s799 = vtos %v798
    %s800 = scalar_lea.smem [#allocation2], 0
    %801 = sst [smem:[%s800]] %s799
    // Predicated region
    $region6: #{yolo_loss.1} parent=1 // pred_check
      _
    $region7: #{yolo_loss.1} parent=1 // pred_check_branch
      %803 = sbr.rel (0) target = $region9
    $region8: #{yolo_loss.1} parent=1 // pred_region
      %805 = vsyncadd [#allocation3], 0
      %s807 = sshll.u32 %s1, 4
      %s808 = int_to_ptr.hbm [resolvable:$true] %s807
      %810 = dma.smem_to_hbm [#allocation2], 16, %s808, [#allocation3]
    $region9: #{yolo_loss.1} parent=1 // pred_fallthru
      _
    // Predicated region
    $region10: #{yolo_loss.1} parent=1 // pred_check
      _
    $region11: #{yolo_loss.1} parent=1 // pred_check_branch
      %812 = sbr.rel (0) target = $region13
    $region12: #{yolo_loss.1} parent=1 // pred_region
      %814 = dma.done [#allocation3], 16
    $region13: #{yolo_loss.1} parent=1 // pred_fallthru
      _
    %815 = sfence
    %816 = vsyncpa [#allocation3], 1

</llo_original>
